<compile_context>
chip_gen: v7x
topology: tpu7x:2x2x1
jax: 0.10.0
libtpu: 0.0.40
codegen_flags: <defaults>
</compile_context>

<pallas_src>
import jax
import jax.numpy as jnp
from jax import lax
from jax.experimental import pallas as pl
from jax.experimental.pallas import tpu as pltpu


_NEG_LARGE = -1e30  # bias fill for padded vocab columns (never wins the softmax)


def _round_up(x, m):
    return (x + m - 1) // m * m


def _gather_hidden(idx_ref, enc_w_ref, hid_sc, row_tile, row_block):
    """hid_sc[r, :] = enc_w[idx[row_tile*row_block + r], :] (encoder == embedding)."""
    vocab = enc_w_ref.shape[0]

    def body(r, carry):
        w = idx_ref[row_tile * row_block + r]
        w = jnp.minimum(jnp.maximum(w, 0), vocab - 1)   # guard OOB (no HW check in VMEM)
        hid_sc[pl.ds(r, 1), :] = enc_w_ref[pl.ds(w, 1), :]
        return carry

    lax.fori_loop(0, row_block, body, 0, unroll=min(row_block, 8))


def _make_single_tile_kernel(encoding, row_block):
    """Whole (padded) vocab fits in one lane-dense tile -> one-pass log-softmax."""

    def kernel(idx_ref,      # SMEM (N_pad,) int32
               enc_w_ref,    # VMEM (V, H) f32
               enc_b_ref,    # VMEM (1, H) f32
               dec_w_ref,    # VMEM (H, V_pad) bf16
               dec_b_ref,    # VMEM (1, V_pad) f32
               *refs):
        if encoding:
            logp_ref, hid_out_ref, hid_sc = refs
        else:
            logp_ref, hid_sc = refs
            hid_out_ref = None

        i = pl.program_id(0)
        _gather_hidden(idx_ref, enc_w_ref, hid_sc, i, row_block)
        hid = hid_sc[...] + enc_b_ref[...]
        if encoding:
            hid_out_ref[...] = hid

        logits = jnp.dot(hid.astype(jnp.bfloat16), dec_w_ref[...],
                         preferred_element_type=jnp.float32) + dec_b_ref[...]
        m = jnp.max(logits, axis=-1, keepdims=True)
        lse = m + jnp.log(jnp.sum(jnp.exp(logits - m), axis=-1, keepdims=True))
        logp_ref[...] = logits - lse

    return kernel


def _make_tiled_kernel(encoding, row_block, n_vt):
    """Vocab streamed in tiles: phase 0 accumulate + stash, phase 1 emit."""

    def kernel(idx_ref,      # SMEM (N_pad,) int32
               enc_w_ref,    # VMEM (V, H) f32
               enc_b_ref,    # VMEM (1, H) f32
               dec_w_ref,    # VMEM (H, col_block) bf16   (streamed tile)
               dec_b_ref,    # VMEM (1, col_block) f32    (streamed tile)
               *refs):
        if encoding:
            logp_ref, hid_out_ref, logits_sc, hid_sc, hid_bf_sc, m_sc, l_sc = refs
        else:
            logp_ref, logits_sc, hid_sc, hid_bf_sc, m_sc, l_sc = refs
            hid_out_ref = None

        i = pl.program_id(0)          # row tile
        j = pl.program_id(1)          # [0, 2*n_vt): phase 0 accumulate, phase 1 emit

        @pl.when(j == 0)
        def _init():
            _gather_hidden(idx_ref, enc_w_ref, hid_sc, i, row_block)
            hid = hid_sc[...] + enc_b_ref[...]
            hid_bf_sc[...] = hid.astype(jnp.bfloat16)   # cast once per row tile
            m_sc[...] = jnp.full_like(m_sc, -jnp.inf)
            l_sc[...] = jnp.zeros_like(l_sc)
            if encoding:
                hid_out_ref[...] = hid

        @pl.when(j < n_vt)
        def _accumulate():
            # decoder tile on the MXU: (tN, H) @ (H, tV), bf16 in, f32 accumulate
            logits = jnp.dot(hid_bf_sc[...], dec_w_ref[...],
                             preferred_element_type=jnp.float32) + dec_b_ref[...]
            logits_sc[j] = logits
            # online log-sum-exp over vocab tiles
            tile_max = jnp.max(logits, axis=-1, keepdims=True)
            m_new = jnp.maximum(m_sc[...], tile_max)
            l_sc[...] = (l_sc[...] * jnp.exp(m_sc[...] - m_new)
                         + jnp.sum(jnp.exp(logits - m_new), axis=-1, keepdims=True))
            m_sc[...] = m_new

        @pl.when(j == n_vt - 1)
        def _finalize_lse():
            # fold log(sum-exp) into the running max -> m_sc now holds the LSE
            m_sc[...] = m_sc[...] + jnp.log(l_sc[...])

        @pl.when(j >= n_vt)
        def _emit():
            jj = j - n_vt
            logp_ref[...] = logits_sc[jj] - m_sc[...]

    return kernel


def skipgram_forward(center_vec, enc_w_t, enc_b, dec_w_t, dec_b, *,
                     encoding=False, row_block=None, col_block=512):
    """Forward pass of the SkipGram module.

    enc_w_t: (V, H) f32 = encoder.weight.T  (hidden = one_hot @ enc_w_t + enc_b)
    dec_w_t: (H, V) f32 = decoder.weight.T  (logits = hidden @ dec_w_t + dec_b)
    Returns log_probs (N, V) [and hidden (N, H) if encoding=True].
    """
    idx = jnp.asarray(center_vec).reshape(-1).astype(jnp.int32)
    N = idx.shape[0]
    V, H = enc_w_t.shape

    # Row tiling: pad batch to a sublane multiple.
    if row_block is None:
        row_block = min(128, _round_up(N, 8))
    row_block = max(8, _round_up(row_block, 8))
    n_pad = _round_up(N, row_block)
    n_rt = n_pad // row_block

    # Vocab tiling: lane-dense tiles (multiple of 128).
    col_block = min(col_block, _round_up(V, 128))
    col_block = _round_up(col_block, 128)
    v_pad = _round_up(V, col_block)
    n_vt = v_pad // col_block

    # Padded operands.  Padded rows gather row 0 (sliced off below); padded vocab
    # columns get zero weights and a huge negative bias so they never affect the
    # softmax statistics.
    idx_pad = jnp.zeros((n_pad,), jnp.int32).at[:N].set(idx)
    enc_w = enc_w_t.astype(jnp.float32)
    enc_b2 = enc_b.reshape(1, H).astype(jnp.float32)
    dec_w = jnp.zeros((H, v_pad), jnp.bfloat16).at[:, :V].set(dec_w_t.astype(jnp.bfloat16))
    dec_b2 = jnp.full((1, v_pad), _NEG_LARGE, jnp.float32).at[:, :V].set(
        dec_b.reshape(1, V).astype(jnp.float32))

    out_shape = [jax.ShapeDtypeStruct((n_pad, v_pad), jnp.float32)]
    if encoding:
        out_shape.append(jax.ShapeDtypeStruct((n_pad, H), jnp.float32))

    if n_vt == 1:
        # ---- fast path: single vocab tile, single pass per row tile ----
        out_specs = [pl.BlockSpec((row_block, v_pad), lambda i, idx_r: (i, 0))]
        if encoding:
            out_specs.append(pl.BlockSpec((row_block, H), lambda i, idx_r: (i, 0)))
        grid_spec = pltpu.PrefetchScalarGridSpec(
            num_scalar_prefetch=1,
            grid=(n_rt,),
            in_specs=[
                pl.BlockSpec((V, H), lambda i, idx_r: (0, 0)),       # enc table
                pl.BlockSpec((1, H), lambda i, idx_r: (0, 0)),       # enc bias
                pl.BlockSpec((H, v_pad), lambda i, idx_r: (0, 0)),   # full decoder
                pl.BlockSpec((1, v_pad), lambda i, idx_r: (0, 0)),   # full dec bias
            ],
            out_specs=tuple(out_specs),
            scratch_shapes=[pltpu.VMEM((row_block, H), jnp.float32)],  # hidden
        )
        kernel = _make_single_tile_kernel(encoding, row_block)
        dim_sem = ("parallel",)
    else:
        # ---- tiled path: stream decoder tiles, online log-sum-exp, then emit ----
        out_specs = [pl.BlockSpec((row_block, col_block),
                                  lambda i, j, idx_r: (i, jnp.maximum(j - n_vt, 0)))]
        if encoding:
            out_specs.append(pl.BlockSpec((row_block, H), lambda i, j, idx_r: (i, 0)))
        grid_spec = pltpu.PrefetchScalarGridSpec(
            num_scalar_prefetch=1,
            grid=(n_rt, 2 * n_vt),
            in_specs=[
                pl.BlockSpec((V, H), lambda i, j, idx_r: (0, 0)),            # enc table
                pl.BlockSpec((1, H), lambda i, j, idx_r: (0, 0)),            # enc bias
                pl.BlockSpec((H, col_block),
                             lambda i, j, idx_r: (0, jnp.minimum(j, n_vt - 1))),  # dec tile
                pl.BlockSpec((1, col_block),
                             lambda i, j, idx_r: (0, jnp.minimum(j, n_vt - 1))),  # dec bias
            ],
            out_specs=tuple(out_specs),
            scratch_shapes=[
                pltpu.VMEM((n_vt, row_block, col_block), jnp.float32),  # stashed logits
                pltpu.VMEM((row_block, H), jnp.float32),                # hidden (f32)
                pltpu.VMEM((row_block, H), jnp.bfloat16),               # hidden (bf16)
                pltpu.VMEM((row_block, 1), jnp.float32),                # running max / lse
                pltpu.VMEM((row_block, 1), jnp.float32),                # running sum-exp
            ],
        )
        kernel = _make_tiled_kernel(encoding, row_block, n_vt)
        dim_sem = ("parallel", "arbitrary")

    outs = pl.pallas_call(
        kernel,
        grid_spec=grid_spec,
        out_shape=tuple(out_shape),
        compiler_params=pltpu.CompilerParams(dimension_semantics=dim_sem),
    )(idx_pad, enc_w, enc_b2, dec_w, dec_b2)

    if encoding:
        logp_pad, hid_pad = outs
        return logp_pad[:N, :V], hid_pad[:N]
    (logp_pad,) = outs
    return logp_pad[:N, :V]


if __name__ == "__main__":
    vocab_size = 512
    hidden_size = 32
    batch = 6          # deliberately not a multiple of 8 -> exercises row padding

    key = jax.random.PRNGKey(0)
    k1, k2, k3, k4, k5 = jax.random.split(key, 5)

    # Linear params stored transposed for the x @ W layout used by the kernel.
    enc_w_t = jax.random.normal(k1, (vocab_size, hidden_size), jnp.float32) * 0.05
    enc_b = jax.random.normal(k2, (hidden_size,), jnp.float32) * 0.05
    dec_w_t = jax.random.normal(k3, (hidden_size, vocab_size), jnp.float32) * 0.05
    dec_b = jax.random.normal(k4, (vocab_size,), jnp.float32) * 0.05

    center_vec = jax.random.randint(k5, (batch,), 0, vocab_size, jnp.int32)

    # Pure-JAX reference with the same bf16 decoder-weight quantization.
    emb = jax.nn.one_hot(center_vec, vocab_size, dtype=jnp.float32)
    hid_ref = emb @ enc_w_t + enc_b
    dec_w_q = dec_w_t.astype(jnp.bfloat16).astype(jnp.float32)
    logits_ref = hid_ref.astype(jnp.bfloat16).astype(jnp.float32) @ dec_w_q + dec_b
    logp_ref = jax.nn.log_softmax(logits_ref, axis=1)

    # Tiled path: col_block=128 -> 4 vocab tiles (online log-sum-exp + emit).
    log_probs, hidden = skipgram_forward(center_vec, enc_w_t, enc_b, dec_w_t, dec_b,
                                         encoding=True, col_block=128)
    jax.block_until_ready((log_probs, hidden))

    assert hidden.shape == (batch, hidden_size)
    assert log_probs.shape == (batch, vocab_size)
    assert jnp.allclose(hidden, hid_ref, atol=1e-4), \
        float(jnp.max(jnp.abs(hidden - hid_ref)))
    assert jnp.allclose(log_probs, logp_ref, atol=2e-3, rtol=2e-3), \
        float(jnp.max(jnp.abs(log_probs - logp_ref)))

    # Fast path: default col_block=512 covers the whole vocab in one tile.
    log_probs_fast, hidden_fast = skipgram_forward(center_vec, enc_w_t, enc_b,
                                                   dec_w_t, dec_b, encoding=True)
    jax.block_until_ready((log_probs_fast, hidden_fast))
    assert jnp.allclose(hidden_fast, hid_ref, atol=1e-4)
    assert jnp.allclose(log_probs_fast, logp_ref, atol=2e-3, rtol=2e-3), \
        float(jnp.max(jnp.abs(log_probs_fast - logp_ref)))

    # encoding=False path: hidden output is not allocated / written at all.
    log_probs2 = skipgram_forward(center_vec, enc_w_t, enc_b, dec_w_t, dec_b,
                                  encoding=False, col_block=128)
    jax.block_until_ready(log_probs2)
    assert jnp.allclose(log_probs2, log_probs, atol=1e-6)

    print("KERNEL_OK")
</pallas_src>

<mosaic_0001>
module attributes {stable_mosaic.version = 11 : i64} {
  func.func @kernel(%arg0: i32, %arg1: i32, %arg2: memref<8xi32, #tpu.memory_space<smem>>, %arg3: memref<512x32xf32, #tpu.memory_space<vmem>>, %arg4: memref<1x32xf32, #tpu.memory_space<vmem>>, %arg5: memref<32x128xbf16, #tpu.memory_space<vmem>>, %arg6: memref<1x128xf32, #tpu.memory_space<vmem>>, %arg7: memref<8x128xf32, #tpu.memory_space<vmem>>, %arg8: memref<8x32xf32, #tpu.memory_space<vmem>>, %arg9: memref<4x8x128xf32, #tpu.memory_space<vmem>>, %arg10: memref<8x32xf32, #tpu.memory_space<vmem>>, %arg11: memref<8x32xbf16, #tpu.memory_space<vmem>>, %arg12: memref<8x1xf32, #tpu.memory_space<vmem>>, %arg13: memref<8x1xf32, #tpu.memory_space<vmem>>) attributes {dimension_semantics = [#tpu.dimension_semantics<parallel>, #tpu.dimension_semantics<arbitrary>], iteration_bounds = array<i64: 1, 8>, scalar_prefetch = 1 : i64, scratch_operands = 5 : i64, tpu.core_type = #tpu.core_type<tc>, window_params = [{pipeline_mode = #tpu.pipeline_mode<synchronous>, transform_indices = @transform_0, window_bounds = array<i64: 512, 32>}, {pipeline_mode = #tpu.pipeline_mode<synchronous>, transform_indices = @transform_1, window_bounds = array<i64: 1, 32>}, {transform_indices = @transform_2, window_bounds = array<i64: 32, 128>}, {transform_indices = @transform_3, window_bounds = array<i64: 1, 128>}, {transform_indices = @transform_4, window_bounds = array<i64: 8, 128>}, {transform_indices = @transform_5, window_bounds = array<i64: 8, 32>}]} {
    %c0_i32 = arith.constant 0 : i32
    %0 = arith.cmpi eq, %arg1, %c0_i32 : i32
    %1 = arith.extui %0 : i1 to i32
    %c0_i32_0 = arith.constant 0 : i32
    %2 = arith.cmpi ne, %1, %c0_i32_0 : i32
    scf.if %2 {
      %c0_i32_5 = arith.constant 0 : i32
      %c8_i32 = arith.constant 8 : i32
      %12 = arith.muli %arg0, %c8_i32 : i32
      %13 = arith.addi %12, %c0_i32_5 : i32
      %14 = arith.index_cast %13 : i32 to index
      %15 = memref.load %arg2[%14] : memref<8xi32, #tpu.memory_space<smem>>
      %c0_i32_6 = arith.constant 0 : i32
      %16 = arith.maxsi %15, %c0_i32_6 : i32
      %c511_i32 = arith.constant 511 : i32
      %17 = arith.minsi %16, %c511_i32 : i32
      %18 = arith.index_cast %17 : i32 to index
      %c0 = arith.constant 0 : index
      %19 = vector.load %arg3[%18, %c0] : memref<512x32xf32, #tpu.memory_space<vmem>>, vector<1x32xf32>
      %20 = arith.index_cast %c0_i32_5 : i32 to index
      %c0_7 = arith.constant 0 : index
      %21 = vector.load %arg10[%20, %c0_7] : memref<8x32xf32, #tpu.memory_space<vmem>>, vector<1x32xf32>
      tpu.vector_store %arg10[%20, %c0_7], %19 {strides = array<i32>} : memref<8x32xf32, #tpu.memory_space<vmem>>, vector<1x32xf32>,
      %c1_i32 = arith.constant 1 : i32
      %c8_i32_8 = arith.constant 8 : i32
      %22 = arith.muli %arg0, %c8_i32_8 : i32
      %23 = arith.addi %22, %c1_i32 : i32
      %24 = arith.index_cast %23 : i32 to index
      %25 = memref.load %arg2[%24] : memref<8xi32, #tpu.memory_space<smem>>
      %c0_i32_9 = arith.constant 0 : i32
      %26 = arith.maxsi %25, %c0_i32_9 : i32
      %c511_i32_10 = arith.constant 511 : i32
      %27 = arith.minsi %26, %c511_i32_10 : i32
      %28 = arith.index_cast %27 : i32 to index
      %c0_11 = arith.constant 0 : index
      %29 = vector.load %arg3[%28, %c0_11] : memref<512x32xf32, #tpu.memory_space<vmem>>, vector<1x32xf32>
      %30 = arith.index_cast %c1_i32 : i32 to index
      %c0_12 = arith.constant 0 : index
      %31 = vector.load %arg10[%30, %c0_12] : memref<8x32xf32, #tpu.memory_space<vmem>>, vector<1x32xf32>
      tpu.vector_store %arg10[%30, %c0_12], %29 {strides = array<i32>} : memref<8x32xf32, #tpu.memory_space<vmem>>, vector<1x32xf32>,
      %c2_i32 = arith.constant 2 : i32
      %c8_i32_13 = arith.constant 8 : i32
      %32 = arith.muli %arg0, %c8_i32_13 : i32
      %33 = arith.addi %32, %c2_i32 : i32
      %34 = arith.index_cast %33 : i32 to index
      %35 = memref.load %arg2[%34] : memref<8xi32, #tpu.memory_space<smem>>
      %c0_i32_14 = arith.constant 0 : i32
      %36 = arith.maxsi %35, %c0_i32_14 : i32
      %c511_i32_15 = arith.constant 511 : i32
      %37 = arith.minsi %36, %c511_i32_15 : i32
      %38 = arith.index_cast %37 : i32 to index
      %c0_16 = arith.constant 0 : index
      %39 = vector.load %arg3[%38, %c0_16] : memref<512x32xf32, #tpu.memory_space<vmem>>, vector<1x32xf32>
      %40 = arith.index_cast %c2_i32 : i32 to index
      %c0_17 = arith.constant 0 : index
      %41 = vector.load %arg10[%40, %c0_17] : memref<8x32xf32, #tpu.memory_space<vmem>>, vector<1x32xf32>
      tpu.vector_store %arg10[%40, %c0_17], %39 {strides = array<i32>} : memref<8x32xf32, #tpu.memory_space<vmem>>, vector<1x32xf32>,
      %c3_i32_18 = arith.constant 3 : i32
      %c8_i32_19 = arith.constant 8 : i32
      %42 = arith.muli %arg0, %c8_i32_19 : i32
      %43 = arith.addi %42, %c3_i32_18 : i32
      %44 = arith.index_cast %43 : i32 to index
      %45 = memref.load %arg2[%44] : memref<8xi32, #tpu.memory_space<smem>>
      %c0_i32_20 = arith.constant 0 : i32
      %46 = arith.maxsi %45, %c0_i32_20 : i32
      %c511_i32_21 = arith.constant 511 : i32
      %47 = arith.minsi %46, %c511_i32_21 : i32
      %48 = arith.index_cast %47 : i32 to index
      %c0_22 = arith.constant 0 : index
      %49 = vector.load %arg3[%48, %c0_22] : memref<512x32xf32, #tpu.memory_space<vmem>>, vector<1x32xf32>
      %50 = arith.index_cast %c3_i32_18 : i32 to index
      %c0_23 = arith.constant 0 : index
      %51 = vector.load %arg10[%50, %c0_23] : memref<8x32xf32, #tpu.memory_space<vmem>>, vector<1x32xf32>
      tpu.vector_store %arg10[%50, %c0_23], %49 {strides = array<i32>} : memref<8x32xf32, #tpu.memory_space<vmem>>, vector<1x32xf32>,
      %c4_i32_24 = arith.constant 4 : i32
      %c8_i32_25 = arith.constant 8 : i32
      %52 = arith.muli %arg0, %c8_i32_25 : i32
      %53 = arith.addi %52, %c4_i32_24 : i32
      %54 = arith.index_cast %53 : i32 to index
      %55 = memref.load %arg2[%54] : memref<8xi32, #tpu.memory_space<smem>>
      %c0_i32_26 = arith.constant 0 : i32
      %56 = arith.maxsi %55, %c0_i32_26 : i32
      %c511_i32_27 = arith.constant 511 : i32
      %57 = arith.minsi %56, %c511_i32_27 : i32
      %58 = arith.index_cast %57 : i32 to index
      %c0_28 = arith.constant 0 : index
      %59 = vector.load %arg3[%58, %c0_28] : memref<512x32xf32, #tpu.memory_space<vmem>>, vector<1x32xf32>
      %60 = arith.index_cast %c4_i32_24 : i32 to index
      %c0_29 = arith.constant 0 : index
      %61 = vector.load %arg10[%60, %c0_29] : memref<8x32xf32, #tpu.memory_space<vmem>>, vector<1x32xf32>
      tpu.vector_store %arg10[%60, %c0_29], %59 {strides = array<i32>} : memref<8x32xf32, #tpu.memory_space<vmem>>, vector<1x32xf32>,
      %c5_i32 = arith.constant 5 : i32
      %c8_i32_30 = arith.constant 8 : i32
      %62 = arith.muli %arg0, %c8_i32_30 : i32
      %63 = arith.addi %62, %c5_i32 : i32
      %64 = arith.index_cast %63 : i32 to index
      %65 = memref.load %arg2[%64] : memref<8xi32, #tpu.memory_space<smem>>
      %c0_i32_31 = arith.constant 0 : i32
      %66 = arith.maxsi %65, %c0_i32_31 : i32
      %c511_i32_32 = arith.constant 511 : i32
      %67 = arith.minsi %66, %c511_i32_32 : i32
      %68 = arith.index_cast %67 : i32 to index
      %c0_33 = arith.constant 0 : index
      %69 = vector.load %arg3[%68, %c0_33] : memref<512x32xf32, #tpu.memory_space<vmem>>, vector<1x32xf32>
      %70 = arith.index_cast %c5_i32 : i32 to index
      %c0_34 = arith.constant 0 : index
      %71 = vector.load %arg10[%70, %c0_34] : memref<8x32xf32, #tpu.memory_space<vmem>>, vector<1x32xf32>
      tpu.vector_store %arg10[%70, %c0_34], %69 {strides = array<i32>} : memref<8x32xf32, #tpu.memory_space<vmem>>, vector<1x32xf32>,
      %c6_i32 = arith.constant 6 : i32
      %c8_i32_35 = arith.constant 8 : i32
      %72 = arith.muli %arg0, %c8_i32_35 : i32
      %73 = arith.addi %72, %c6_i32 : i32
      %74 = arith.index_cast %73 : i32 to index
      %75 = memref.load %arg2[%74] : memref<8xi32, #tpu.memory_space<smem>>
      %c0_i32_36 = arith.constant 0 : i32
      %76 = arith.maxsi %75, %c0_i32_36 : i32
      %c511_i32_37 = arith.constant 511 : i32
      %77 = arith.minsi %76, %c511_i32_37 : i32
      %78 = arith.index_cast %77 : i32 to index
      %c0_38 = arith.constant 0 : index
      %79 = vector.load %arg3[%78, %c0_38] : memref<512x32xf32, #tpu.memory_space<vmem>>, vector<1x32xf32>
      %80 = arith.index_cast %c6_i32 : i32 to index
      %c0_39 = arith.constant 0 : index
      %81 = vector.load %arg10[%80, %c0_39] : memref<8x32xf32, #tpu.memory_space<vmem>>, vector<1x32xf32>
      tpu.vector_store %arg10[%80, %c0_39], %79 {strides = array<i32>} : memref<8x32xf32, #tpu.memory_space<vmem>>, vector<1x32xf32>,
      %c7_i32 = arith.constant 7 : i32
      %c8_i32_40 = arith.constant 8 : i32
      %82 = arith.muli %arg0, %c8_i32_40 : i32
      %83 = arith.addi %82, %c7_i32 : i32
      %84 = arith.index_cast %83 : i32 to index
      %85 = memref.load %arg2[%84] : memref<8xi32, #tpu.memory_space<smem>>
      %c0_i32_41 = arith.constant 0 : i32
      %86 = arith.maxsi %85, %c0_i32_41 : i32
      %c511_i32_42 = arith.constant 511 : i32
      %87 = arith.minsi %86, %c511_i32_42 : i32
      %88 = arith.index_cast %87 : i32 to index
      %c0_43 = arith.constant 0 : index
      %89 = vector.load %arg3[%88, %c0_43] : memref<512x32xf32, #tpu.memory_space<vmem>>, vector<1x32xf32>
      %90 = arith.index_cast %c7_i32 : i32 to index
      %c0_44 = arith.constant 0 : index
      %91 = vector.load %arg10[%90, %c0_44] : memref<8x32xf32, #tpu.memory_space<vmem>>, vector<1x32xf32>
      tpu.vector_store %arg10[%90, %c0_44], %89 {strides = array<i32>} : memref<8x32xf32, #tpu.memory_space<vmem>>, vector<1x32xf32>,
      %c8_i32_45 = arith.constant 8 : i32
      %c0_46 = arith.constant 0 : index
      %c0_47 = arith.constant 0 : index
      %92 = vector.load %arg10[%c0_46, %c0_47] : memref<8x32xf32, #tpu.memory_space<vmem>>, vector<8x32xf32>
      %c0_48 = arith.constant 0 : index
      %c0_49 = arith.constant 0 : index
      %93 = vector.load %arg4[%c0_48, %c0_49] : memref<1x32xf32, #tpu.memory_space<vmem>>, vector<1x32xf32>
      %94 = vector.broadcast %93 : vector<1x32xf32> to vector<8x32xf32>
      %95 = arith.addf %92, %94 : vector<8x32xf32>
      %96 = arith.truncf %95 : vector<8x32xf32> to vector<8x32xbf16>
      %c0_50 = arith.constant 0 : index
      %c0_51 = arith.constant 0 : index
      %97 = vector.load %arg11[%c0_50, %c0_51] : memref<8x32xbf16, #tpu.memory_space<vmem>>, vector<8x32xbf16>
      tpu.vector_store %arg11[%c0_50, %c0_51], %96 {strides = array<i32>} : memref<8x32xbf16, #tpu.memory_space<vmem>>, vector<8x32xbf16>,
      %cst = arith.constant 0xFF800000 : f32
      %98 = vector.broadcast %cst : f32 to vector<8x1xf32>
      %c0_52 = arith.constant 0 : index
      %c0_53 = arith.constant 0 : index
      %99 = vector.load %arg12[%c0_52, %c0_53] : memref<8x1xf32, #tpu.memory_space<vmem>>, vector<8x1xf32>
      tpu.vector_store %arg12[%c0_52, %c0_53], %98 {strides = array<i32>} : memref<8x1xf32, #tpu.memory_space<vmem>>, vector<8x1xf32>,
      %cst_54 = arith.constant 0.000000e+00 : f32
      %100 = vector.broadcast %cst_54 : f32 to vector<8x1xf32>
      %c0_55 = arith.constant 0 : index
      %c0_56 = arith.constant 0 : index
      %101 = vector.load %arg13[%c0_55, %c0_56] : memref<8x1xf32, #tpu.memory_space<vmem>>, vector<8x1xf32>
      tpu.vector_store %arg13[%c0_55, %c0_56], %100 {strides = array<i32>} : memref<8x1xf32, #tpu.memory_space<vmem>>, vector<8x1xf32>,
      %c0_57 = arith.constant 0 : index
      %c0_58 = arith.constant 0 : index
      %102 = vector.load %arg8[%c0_57, %c0_58] : memref<8x32xf32, #tpu.memory_space<vmem>>, vector<8x32xf32>
      tpu.vector_store %arg8[%c0_57, %c0_58], %95 {strides = array<i32>} : memref<8x32xf32, #tpu.memory_space<vmem>>, vector<8x32xf32>,
    } else {
    }
    %c4_i32 = arith.constant 4 : i32
    %3 = arith.cmpi slt, %arg1, %c4_i32 : i32
    %4 = arith.extui %3 : i1 to i32
    %c0_i32_1 = arith.constant 0 : i32
    %5 = arith.cmpi ne, %4, %c0_i32_1 : i32
    scf.if %5 {
      %c0 = arith.constant 0 : index
      %c0_5 = arith.constant 0 : index
      %12 = vector.load %arg11[%c0, %c0_5] : memref<8x32xbf16, #tpu.memory_space<vmem>>, vector<8x32xbf16>
      %c0_6 = arith.constant 0 : index
      %c0_7 = arith.constant 0 : index
      %13 = vector.load %arg5[%c0_6, %c0_7] : memref<32x128xbf16, #tpu.memory_space<vmem>>, vector<32x128xbf16>
      %cst = arith.constant dense<0.000000e+00> : vector<8x128xf32>
      %14 = tpu.matmul %12, %13, %cst {dimension_numbers = #tpu.dot_dimension_numbers<[1], [0], [0], [1], [0, 0, 1, 1], [], []>} : vector<8x32xbf16>, vector<32x128xbf16>, vector<8x128xf32> -> vector<8x128xf32>
      %c0_8 = arith.constant 0 : index
      %c0_9 = arith.constant 0 : index
      %15 = vector.load %arg6[%c0_8, %c0_9] : memref<1x128xf32, #tpu.memory_space<vmem>>, vector<1x128xf32>
      %16 = vector.broadcast %15 : vector<1x128xf32> to vector<8x128xf32>
      %17 = arith.addf %14, %16 : vector<8x128xf32>
      %18 = arith.index_cast %arg1 : i32 to index
      %c0_10 = arith.constant 0 : index
      %c0_11 = arith.constant 0 : index
      %19 = vector.load %arg9[%18, %c0_10, %c0_11] : memref<4x8x128xf32, #tpu.memory_space<vmem>>, vector<1x8x128xf32>
      %20 = vector.shape_cast %19 : vector<1x8x128xf32> to vector<8x128xf32>
      %21 = vector.shape_cast %17 : vector<8x128xf32> to vector<1x8x128xf32>
      tpu.vector_store %arg9[%18, %c0_10, %c0_11], %21 {strides = array<i32>} : memref<4x8x128xf32, #tpu.memory_space<vmem>>, vector<1x8x128xf32>,
      %cst_12 = arith.constant dense<0xFF800000> : vector<8xf32>
      %22 = vector.multi_reduction <maximumf>, %17, %cst_12 [1] : vector<8x128xf32> to vector<8xf32>
      %23 = vector.shape_cast %22 : vector<8xf32> to vector<8x1xf32>
      %c0_13 = arith.constant 0 : index
      %c0_14 = arith.constant 0 : index
      %24 = vector.load %arg12[%c0_13, %c0_14] : memref<8x1xf32, #tpu.memory_space<vmem>>, vector<8x1xf32>
      %25 = arith.maximumf %24, %23 : vector<8x1xf32>
      %c0_15 = arith.constant 0 : index
      %c0_16 = arith.constant 0 : index
      %26 = vector.load %arg13[%c0_15, %c0_16] : memref<8x1xf32, #tpu.memory_space<vmem>>, vector<8x1xf32>
      %c0_17 = arith.constant 0 : index
      %c0_18 = arith.constant 0 : index
      %27 = vector.load %arg12[%c0_17, %c0_18] : memref<8x1xf32, #tpu.memory_space<vmem>>, vector<8x1xf32>
      %28 = arith.subf %27, %25 : vector<8x1xf32>
      %29 = math.exp %28 : vector<8x1xf32>
      %30 = arith.mulf %26, %29 : vector<8x1xf32>
      %31 = vector.broadcast %25 : vector<8x1xf32> to vector<8x128xf32>
      %32 = arith.subf %17, %31 : vector<8x128xf32>
      %33 = math.exp %32 : vector<8x128xf32>
      %cst_19 = arith.constant dense<0.000000e+00> : vector<8xf32>
      %34 = vector.multi_reduction <add>, %33, %cst_19 [1] : vector<8x128xf32> to vector<8xf32>
      %35 = vector.shape_cast %34 : vector<8xf32> to vector<8x1xf32>
      %36 = arith.addf %30, %35 : vector<8x1xf32>
      %c0_20 = arith.constant 0 : index
      %c0_21 = arith.constant 0 : index
      %37 = vector.load %arg13[%c0_20, %c0_21] : memref<8x1xf32, #tpu.memory_space<vmem>>, vector<8x1xf32>
      tpu.vector_store %arg13[%c0_20, %c0_21], %36 {strides = array<i32>} : memref<8x1xf32, #tpu.memory_space<vmem>>, vector<8x1xf32>,
      %c0_22 = arith.constant 0 : index
      %c0_23 = arith.constant 0 : index
      %38 = vector.load %arg12[%c0_22, %c0_23] : memref<8x1xf32, #tpu.memory_space<vmem>>, vector<8x1xf32>
      tpu.vector_store %arg12[%c0_22, %c0_23], %25 {strides = array<i32>} : memref<8x1xf32, #tpu.memory_space<vmem>>, vector<8x1xf32>,
    } else {
    }
    %c3_i32 = arith.constant 3 : i32
    %6 = arith.cmpi eq, %arg1, %c3_i32 : i32
    %7 = arith.extui %6 : i1 to i32
    %c0_i32_2 = arith.constant 0 : i32
    %8 = arith.cmpi ne, %7, %c0_i32_2 : i32
    scf.if %8 {
      %c0 = arith.constant 0 : index
      %c0_5 = arith.constant 0 : index
      %12 = vector.load %arg12[%c0, %c0_5] : memref<8x1xf32, #tpu.memory_space<vmem>>, vector<8x1xf32>
      %c0_6 = arith.constant 0 : index
      %c0_7 = arith.constant 0 : index
      %13 = vector.load %arg13[%c0_6, %c0_7] : memref<8x1xf32, #tpu.memory_space<vmem>>, vector<8x1xf32>
      %14 = math.log %13 : vector<8x1xf32>
      %15 = arith.addf %12, %14 : vector<8x1xf32>
      %c0_8 = arith.constant 0 : index
      %c0_9 = arith.constant 0 : index
      %16 = vector.load %arg12[%c0_8, %c0_9] : memref<8x1xf32, #tpu.memory_space<vmem>>, vector<8x1xf32>
      tpu.vector_store %arg12[%c0_8, %c0_9], %15 {strides = array<i32>} : memref<8x1xf32, #tpu.memory_space<vmem>>, vector<8x1xf32>,
    } else {
    }
    %c4_i32_3 = arith.constant 4 : i32
    %9 = arith.cmpi sge, %arg1, %c4_i32_3 : i32
    %10 = arith.extui %9 : i1 to i32
    %c0_i32_4 = arith.constant 0 : i32
    %11 = arith.cmpi ne, %10, %c0_i32_4 : i32
    scf.if %11 {
      %c4_i32_5 = arith.constant 4 : i32
      %12 = arith.subi %arg1, %c4_i32_5 : i32
      %13 = arith.index_cast %12 : i32 to index
      %c0 = arith.constant 0 : index
      %c0_6 = arith.constant 0 : index
      %14 = vector.load %arg9[%13, %c0, %c0_6] : memref<4x8x128xf32, #tpu.memory_space<vmem>>, vector<1x8x128xf32>
      %15 = vector.shape_cast %14 : vector<1x8x128xf32> to vector<8x128xf32>
      %c0_7 = arith.constant 0 : index
      %c0_8 = arith.constant 0 : index
      %16 = vector.load %arg12[%c0_7, %c0_8] : memref<8x1xf32, #tpu.memory_space<vmem>>, vector<8x1xf32>
      %17 = vector.broadcast %16 : vector<8x1xf32> to vector<8x128xf32>
      %18 = arith.subf %15, %17 : vector<8x128xf32>
      %c0_9 = arith.constant 0 : index
      %c0_10 = arith.constant 0 : index
      %19 = vector.load %arg7[%c0_9, %c0_10] : memref<8x128xf32, #tpu.memory_space<vmem>>, vector<8x128xf32>
      tpu.vector_store %arg7[%c0_9, %c0_10], %18 {strides = array<i32>} : memref<8x128xf32, #tpu.memory_space<vmem>>, vector<8x128xf32>,
    } else {
    }
    return
  }
  func.func @transform_0(%arg0: i32, %arg1: i32, %arg2: memref<8xi32, #tpu.memory_space<smem>>) -> (i32, i32) {
    %c0_i32 = arith.constant 0 : i32
    %c0_i32_0 = arith.constant 0 : i32
    %c0_i32_1 = arith.constant 0 : i32
    return %c0_i32, %c0_i32_0 : i32, i32
  }
  func.func @transform_1(%arg0: i32, %arg1: i32, %arg2: memref<8xi32, #tpu.memory_space<smem>>) -> (i32, i32) {
    %c0_i32 = arith.constant 0 : i32
    %c0_i32_0 = arith.constant 0 : i32
    %c0_i32_1 = arith.constant 0 : i32
    return %c0_i32, %c0_i32_0 : i32, i32
  }
  func.func @transform_2(%arg0: i32, %arg1: i32, %arg2: memref<8xi32, #tpu.memory_space<smem>>) -> (i32, i32) {
    %c3_i32 = arith.constant 3 : i32
    %0 = arith.minsi %arg1, %c3_i32 : i32
    %c0_i32 = arith.constant 0 : i32
    %c0_i32_0 = arith.constant 0 : i32
    return %c0_i32, %0 : i32, i32
  }
  func.func @transform_3(%arg0: i32, %arg1: i32, %arg2: memref<8xi32, #tpu.memory_space<smem>>) -> (i32, i32) {
    %c3_i32 = arith.constant 3 : i32
    %0 = arith.minsi %arg1, %c3_i32 : i32
    %c0_i32 = arith.constant 0 : i32
    %c0_i32_0 = arith.constant 0 : i32
    return %c0_i32, %0 : i32, i32
  }
  func.func @transform_4(%arg0: i32, %arg1: i32, %arg2: memref<8xi32, #tpu.memory_space<smem>>) -> (i32, i32) {
    %c4_i32 = arith.constant 4 : i32
    %0 = arith.subi %arg1, %c4_i32 : i32
    %c0_i32 = arith.constant 0 : i32
    %1 = arith.maxsi %0, %c0_i32 : i32
    %c0_i32_0 = arith.constant 0 : i32
    return %arg0, %1 : i32, i32
  }
  func.func @transform_5(%arg0: i32, %arg1: i32, %arg2: memref<8xi32, #tpu.memory_space<smem>>) -> (i32, i32) {
    %c0_i32 = arith.constant 0 : i32
    %c0_i32_0 = arith.constant 0 : i32
    return %arg0, %c0_i32 : i32, i32
  }
}

</mosaic_0001>

<llo_original>
// kernel: tpu_custom_call.1
$region0: #{tpu_custom_call.1}
  #allocation0 [shape = 'u32[]', space=smem, size = 0x4, offset = 0x4, fixed_abs, tag = 'smem constant byte address 0x4 - core index']
  #allocation1 [shape = 'u32[144,128]{1,0:T(1,128)}', space=vmem, size = 0x12000, scoped, tag = 'internal scratch']
  #allocation2 [shape = 'f32[4,8,128]{2,1,0:T(8,128)}', space=vmem, size = 0x4000, scoped, tag = 'scratch operand']
  #allocation3 [shape = 'f32[8,32]{1,0:T(8,128)}', space=vmem, size = 0x1000, scoped, tag = 'scratch operand']
  #allocation4 [shape = 'bf16[8,32]{1,0:T(8,128)(2,1)}', space=vmem, size = 0x800, scoped, tag = 'scratch operand']
  #allocation5 [shape = 'f32[8,1]{1,0:T(8,128)}', space=vmem, size = 0x1000, scoped, tag = 'scratch operand']
  #allocation6 [shape = 'f32[8,1]{1,0:T(8,128)}', space=vmem, size = 0x1000, scoped, tag = 'scratch operand']
  #allocation7 [shape = 's32[1]{0}', space=sflag, size = 0x4, scoped, tag = 'scoped memory for tpu_custom_call.1']
  #allocation8 [shape = 'u8[512]{0}', space=smem, size = 0x200, scoped, tag = 'prefetched SMEM operand 0']
  %s0 = inlined_call_operand.vmem [shape: s32[8], index: 0, kind: input, shape index: {}]
  %s1 = inlined_call_operand.vmem [shape: f32[512,32], index: 1, kind: input, shape index: {}]
  %s2 = inlined_call_operand.vmem [shape: f32[1,32], index: 2, kind: input, shape index: {}]
  %s3 = inlined_call_operand.vmem [shape: bf16[32,512], index: 3, kind: input, shape index: {}]
  %s4 = inlined_call_operand.vmem [shape: f32[1,512], index: 4, kind: input, shape index: {}]
  %s5 = inlined_call_operand.hbm [shape: f32[8,512], index: 5, kind: output, shape index: {0}]
  %s6 = inlined_call_operand.hbm [shape: f32[8,32], index: 6, kind: output, shape index: {1}]
  %7 = xla_tuple %s5, %s6
  %s8 = sld [smem:[#allocation0]]
  $region114: #{tpu_custom_call.1} parent=0
    _
  %s10 = ssub.s32 1, %s8
  %s11 = scalar_select 0, %s10, %s8
  %s12 = sshll.u32 %s0, 4
  %s13 = int_to_ptr.vmem [resolvable:$true] %s12
  %15 = dma.vmem_to_smem %s13, 16, [#allocation8], [#allocation7]
  %16 = dma.done [#allocation7], 16
  %17 = sfence
  $region1: #{tpu_custom_call.1} parent=0
    #allocation9 [shape = 'u8[16384]{0}', space=vmem, size = 0x4000, scoped, tag = 'input window, operand 3']
    #allocation10 [shape = 'u8[8192]{0}', space=vmem, size = 0x2000, scoped, tag = 'output window, operand 0']
    #allocation11 [shape = 's32[2]{0}', space=sflag, size = 0x8, scoped, tag = 'scoped memory for tpu_custom_call.1']
    #allocation12 [shape = 'u8[4096]{0}', space=vmem, size = 0x1000, scoped, tag = 'output window, operand 1, single buffered']
    #allocation13 [shape = 's32[1]{0}', space=sflag, size = 0x4, scoped, tag = 'scoped memory for tpu_custom_call.1']
    %18 = vsyncpa [#allocation11], 0
    %s19 = scalar_lea.sflag [#allocation11], 1
    %20 = vsyncpa %s19, 0
    %21 = vsyncpa [#allocation13], 0
    loop: start=0, step=1, limit=10
    $region2: #{tpu_custom_call.1} parent=1 // loop_pre_header
      _
    $region3: #{tpu_custom_call.1} parent=1 // loop_header
      %s23 = sphi 0, %s27
      %p24 = scmp.ge.s32.totalorder %s23, 10
      %s30 = sphi 0, %s42
      %s31 = sphi 0, %s38
      %s32 = sphi 0, %s30
      %s33 = sphi 0, %s31
      %s34 = sphi 0, %s32
      %s35 = sphi 0, %s33
      %s43 = sphi 0, %s43
      %s45 = sphi 0, %s43
      %s46 = sphi 0, %s45
      %s60 = sphi 0, %s46
      %s64 = sphi 0, %s64
      %s66 = sphi 0, %s64
      %s67 = sphi 0, %s66
      %s81 = sphi 0, %s67
      %s91 = sphi 0, %s93
      %s94 = sphi 0, %s91
      %s95 = sphi 0, %s94
      %s111 = sphi 0, %s95
      %s121 = sphi 0, %s123
      %s124 = sphi 0, %s121
      %s125 = sphi 0, %s124
      %s141 = sphi 0, %s125
      %s155 = sphi 0, %s157
      %s158 = sphi 0, %s155
      %s159 = sphi 0, %s158
      %s175 = sphi 0, %s159
      %s181 = sphi 0, %s183
      %s184 = sphi 0, %s181
      %s185 = sphi 0, %s184
      %s201 = sphi 0, %s185
    $region4: #{tpu_custom_call.1} parent=1 // loop_header_branch
      %26 = sbr.rel (%p24) target = $region8
    $region5: #{tpu_custom_call.1} parent=1 // loop_body
      %s28 = ssub.s32 %s23, 1
      %s29 = ssub.s32 %s23, 2
      %s36 = sadd.s32 1, %s31
      %p37 = scmp.ge.s32.totalorder %s36, 8
      %s38 = scalar_select %p37, 0, %s36
      %s39 = sadd.s32 1, %s30
      %s40 = scalar_select %p37, %s39, %s30
      %p41 = scmp.ge.s32.totalorder %s40, 1
      %s42 = scalar_select %p41, 0, %s40
      %s44 = sadd.s32 %s43, 1
      %p47 = scmp.eq.s32.totalorder %s23, 7
      %p48 = scmp.ne.s32.totalorder %s43, %s45
      %p49 = scmp.eq.s32.totalorder %s23, 0
      %p50 = por %p48, %p49
      %p51 = scmp.ne.s32.totalorder %s43, %s45
      %p52 = scmp.eq.s32.totalorder %s28, 7
      %p53 = por %p51, %p52
      %p54 = scmp.ne.s32.totalorder %s45, %s46
      %p55 = scmp.eq.s32.totalorder %s28, 0
      %p56 = por %p54, %p55
      %p57 = scmp.ne.s32.totalorder %s45, %s46
      %p58 = scmp.eq.s32.totalorder %s29, 7
      %p59 = por %p57, %p58
      %p61 = scmp.ne.s32.totalorder %s46, %s60
      %p62 = scmp.eq.s32.totalorder %s29, 0
      %p63 = por %p61, %p62
      %s65 = sadd.s32 %s64, 1
      %p68 = scmp.eq.s32.totalorder %s23, 7
      %p69 = scmp.ne.s32.totalorder %s64, %s66
      %p70 = scmp.eq.s32.totalorder %s23, 0
      %p71 = por %p69, %p70
      %p72 = scmp.ne.s32.totalorder %s64, %s66
      %p73 = scmp.eq.s32.totalorder %s28, 7
      %p74 = por %p72, %p73
      %p75 = scmp.ne.s32.totalorder %s66, %s67
      %p76 = scmp.eq.s32.totalorder %s28, 0
      %p77 = por %p75, %p76
      %p78 = scmp.ne.s32.totalorder %s66, %s67
      %p79 = scmp.eq.s32.totalorder %s29, 7
      %p80 = por %p78, %p79
      %p82 = scmp.ne.s32.totalorder %s67, %s81
      %p83 = scmp.eq.s32.totalorder %s29, 0
      %p84 = por %p82, %p83
      %p85 = scmp.lt.s32.totalorder %s31, 3
      %s86 = scalar_select %p85, %s31, 3
      %p87 = scmp.lt.s32.totalorder %s38, 3
      %s88 = scalar_select %p87, %s38, 3
      %s89 = ssub.s32 %s86, %s88
      %p90 = scmp.eq.s32.totalorder %s89, 0
      %s92 = sadd.s32 %s91, 1
      %s93 = scalar_select %p90, %s91, %s92
      %p96 = pneg %p90
      %p97 = scmp.eq.s32.totalorder %s23, 7
      %p98 = por %p96, %p97
      %p99 = scmp.ne.s32.totalorder %s91, %s94
      %p100 = scmp.eq.s32.totalorder %s23, 0
      %p101 = por %p99, %p100
      %p102 = scmp.ne.s32.totalorder %s91, %s94
      %p103 = scmp.eq.s32.totalorder %s28, 7
      %p104 = por %p102, %p103
      %p105 = scmp.ne.s32.totalorder %s94, %s95
      %p106 = scmp.eq.s32.totalorder %s28, 0
      %p107 = por %p105, %p106
      %p108 = scmp.ne.s32.totalorder %s94, %s95
      %p109 = scmp.eq.s32.totalorder %s29, 7
      %p110 = por %p108, %p109
      %p112 = scmp.ne.s32.totalorder %s95, %s111
      %p113 = scmp.eq.s32.totalorder %s29, 0
      %p114 = por %p112, %p113
      %p115 = scmp.lt.s32.totalorder %s31, 3
      %s116 = scalar_select %p115, %s31, 3
      %p117 = scmp.lt.s32.totalorder %s38, 3
      %s118 = scalar_select %p117, %s38, 3
      %s119 = ssub.s32 %s116, %s118
      %p120 = scmp.eq.s32.totalorder %s119, 0
      %s122 = sadd.s32 %s121, 1
      %s123 = scalar_select %p120, %s121, %s122
      %p126 = pneg %p120
      %p127 = scmp.eq.s32.totalorder %s23, 7
      %p128 = por %p126, %p127
      %p129 = scmp.ne.s32.totalorder %s121, %s124
      %p130 = scmp.eq.s32.totalorder %s23, 0
      %p131 = por %p129, %p130
      %p132 = scmp.ne.s32.totalorder %s121, %s124
      %p133 = scmp.eq.s32.totalorder %s28, 7
      %p134 = por %p132, %p133
      %p135 = scmp.ne.s32.totalorder %s124, %s125
      %p136 = scmp.eq.s32.totalorder %s28, 0
      %p137 = por %p135, %p136
      %p138 = scmp.ne.s32.totalorder %s124, %s125
      %p139 = scmp.eq.s32.totalorder %s29, 7
      %p140 = por %p138, %p139
      %p142 = scmp.ne.s32.totalorder %s125, %s141
      %p143 = scmp.eq.s32.totalorder %s29, 0
      %p144 = por %p142, %p143
      %s145 = ssub.s32 %s31, 4
      %p146 = scmp.gt.s32.totalorder %s145, 0
      %s147 = scalar_select %p146, %s145, 0
      %s148 = ssub.s32 %s38, 4
      %p149 = scmp.gt.s32.totalorder %s148, 0
      %s150 = scalar_select %p149, %s148, 0
      %s151 = ssub.s32 %s30, %s42
      %s152 = ssub.s32 %s147, %s150
      %s153 = sor.u32 %s151, %s152
      %p154 = scmp.eq.s32.totalorder %s153, 0
      %s156 = sadd.s32 %s155, 1
      %s157 = scalar_select %p154, %s155, %s156
      %p160 = pneg %p154
      %p161 = scmp.eq.s32.totalorder %s23, 7
      %p162 = por %p160, %p161
      %p163 = scmp.ne.s32.totalorder %s155, %s158
      %p164 = scmp.eq.s32.totalorder %s23, 0
      %p165 = por %p163, %p164
      %p166 = scmp.ne.s32.totalorder %s155, %s158
      %p167 = scmp.eq.s32.totalorder %s28, 7
      %p168 = por %p166, %p167
      %p169 = scmp.ne.s32.totalorder %s158, %s159
      %p170 = scmp.eq.s32.totalorder %s28, 0
      %p171 = por %p169, %p170
      %p172 = scmp.ne.s32.totalorder %s158, %s159
      %p173 = scmp.eq.s32.totalorder %s29, 7
      %p174 = por %p172, %p173
      %p176 = scmp.ne.s32.totalorder %s159, %s175
      %p177 = scmp.eq.s32.totalorder %s29, 0
      %p178 = por %p176, %p177
      %s179 = ssub.s32 %s30, %s42
      %p180 = scmp.eq.s32.totalorder %s179, 0
      %s182 = sadd.s32 %s181, 1
      %s183 = scalar_select %p180, %s181, %s182
      %p186 = pneg %p180
      %p187 = scmp.eq.s32.totalorder %s23, 7
      %p188 = por %p186, %p187
      %p189 = scmp.ne.s32.totalorder %s181, %s184
      %p190 = scmp.eq.s32.totalorder %s23, 0
      %p191 = por %p189, %p190
      %p192 = scmp.ne.s32.totalorder %s181, %s184
      %p193 = scmp.eq.s32.totalorder %s28, 7
      %p194 = por %p192, %p193
      %p195 = scmp.ne.s32.totalorder %s184, %s185
      %p196 = scmp.eq.s32.totalorder %s28, 0
      %p197 = por %p195, %p196
      %p198 = scmp.ne.s32.totalorder %s184, %s185
      %p199 = scmp.eq.s32.totalorder %s29, 7
      %p200 = por %p198, %p199
      %p202 = scmp.ne.s32.totalorder %s185, %s201
      %p203 = scmp.eq.s32.totalorder %s29, 0
      %p204 = por %p202, %p203
      %p205 = scmp.le.s32.totalorder 1, %s23
      %p206 = scmp.lt.s32.totalorder %s23, 9
      %p207 = pnand %p205, %p206
      %p208 = pneg %p207
      // Predicated region
      $region9: #{tpu_custom_call.1} parent=5 // pred_check
        _
      $region10: #{tpu_custom_call.1} parent=5 // pred_check_branch
        %210 = sbr.rel (%p207) target = $region12
      $region11: #{tpu_custom_call.1} parent=5 // pred_region
        %s211 = ssub.s32 %s23, 1
        // Predicated region
        $region13: #{tpu_custom_call.1} parent=11 // pred_check
          %p212 = pneg %p56
        $region14: #{tpu_custom_call.1} parent=11 // pred_check_branch
          %214 = sbr.rel (%p212) target = $region16
        $region15: #{tpu_custom_call.1} parent=11 // pred_region
          _
        $region16: #{tpu_custom_call.1} parent=11 // pred_fallthru
          _
        // Predicated region
        $region17: #{tpu_custom_call.1} parent=11 // pred_check
          %p215 = pneg %p77
        $region18: #{tpu_custom_call.1} parent=11 // pred_check_branch
          %217 = sbr.rel (%p215) target = $region20
        $region19: #{tpu_custom_call.1} parent=11 // pred_region
          _
        $region20: #{tpu_custom_call.1} parent=11 // pred_fallthru
          _
      $region12: #{tpu_custom_call.1} parent=5 // pred_fallthru
        _
      %p218 = scmp.lt.s32.totalorder %s23, 8
      // Predicated region
      $region21: #{tpu_custom_call.1} parent=5 // pred_check
        %p219 = pneg %p218
      $region22: #{tpu_custom_call.1} parent=5 // pred_check_branch
        %221 = sbr.rel (%p219) target = $region24
      $region23: #{tpu_custom_call.1} parent=5 // pred_region
        // Predicated region
        $region25: #{tpu_custom_call.1} parent=23 // pred_check
          %p222 = pneg %p101
        $region26: #{tpu_custom_call.1} parent=23 // pred_check_branch
          %224 = sbr.rel (%p222) target = $region28
        $region27: #{tpu_custom_call.1} parent=23 // pred_region
          %s225 = sand.u32 %s91, 1
          %s226 = sand.u32 %s91, 1
          %s227 = smul.addr %s226, 16
          %s228 = scalar_lea.vmem [#allocation9], %s227
          %p229 = scmp.lt.s32.totalorder %s31, 3
          %s230 = scalar_select %p229, %s31, 3
          %s231 = smul.addr %s230, 4
          %s232 = scalar_lea.vmem %s3, %s231
          // Predicated region
          $region29: #{tpu_custom_call.1} parent=27 // pred_check
            _
          $region30: #{tpu_custom_call.1} parent=27 // pred_check_branch
            %234 = sbr.rel (0) target = $region32
          $region31: #{tpu_custom_call.1} parent=27 // pred_region
            // Predicated region
            $region33: #{tpu_custom_call.1} parent=31 // pred_check
              _
            $region34: #{tpu_custom_call.1} parent=31 // pred_check_branch
              %236 = sbr.rel target = $region36
            $region35: #{tpu_custom_call.1} parent=31 // pred_region
              // Predicated region
              $region48: #{tpu_custom_call.1} parent=35 // pred_check
                _
              $region49: #{tpu_custom_call.1} parent=35 // pred_check_branch
                %257 = sbr.rel (0) target = $region51
              $region50: #{tpu_custom_call.1} parent=35 // pred_region
                loop: start=0, step=1, limit=1
                $region52: #{tpu_custom_call.1} parent=50 // loop_pre_header
                  _
                $region53: #{tpu_custom_call.1} parent=50 // loop_header
                  %s259 = sphi 0, %s263
                  %p260 = scmp.ge.s32.totalorder %s259, 1
                  %s264 = sphi %s232, %s232
                  %s265 = sphi %s228, %s228
                $region54: #{tpu_custom_call.1} parent=50 // loop_header_branch
                  %262 = sbr.rel (%p260) target = $region58
                $region55: #{tpu_custom_call.1} parent=50 // loop_body
                  _
                $region56: #{tpu_custom_call.1} parent=50 // loop_footer
                  %s263 = sadd.s32 1, %s259
                $region57: #{tpu_custom_call.1} parent=50 // loop_footer_branch
                  %258 = sbr.rel target = $region53
                $region58: #{tpu_custom_call.1} parent=50 // loop_exit
                  _
                loop: start=0, step=1, limit=1
                $region59: #{tpu_custom_call.1} parent=50 // loop_pre_header
                  _
                $region60: #{tpu_custom_call.1} parent=50 // loop_header
                  %s268 = sphi 0, %s272
                  %p269 = scmp.ge.s32.totalorder %s268, 1
                  %s273 = sphi %s232, %s232
                  %s274 = sphi %s228, %s228
                $region61: #{tpu_custom_call.1} parent=50 // loop_header_branch
                  %271 = sbr.rel (%p269) target = $region65
                $region62: #{tpu_custom_call.1} parent=50 // loop_body
                  %v275 = vld [vmem:[%s273] sm:$0xf]
                  %276 = vst [vmem:[%s274] sm:$0xf] %v275
                  %v277 = vld [vmem:[%s273 + $0x10] sm:$0xf]
                  %278 = vst [vmem:[%s274 + $0x4] sm:$0xf] %v277
                  %v279 = vld [vmem:[%s273 + $0x20] sm:$0xf]
                  %280 = vst [vmem:[%s274 + $0x8] sm:$0xf] %v279
                  %v281 = vld [vmem:[%s273 + $0x30] sm:$0xf]
                  %282 = vst [vmem:[%s274 + $0xc] sm:$0xf] %v281
                $region63: #{tpu_custom_call.1} parent=50 // loop_footer
                  %s272 = sadd.s32 1, %s268
                $region64: #{tpu_custom_call.1} parent=50 // loop_footer_branch
                  %267 = sbr.rel target = $region60
                $region65: #{tpu_custom_call.1} parent=50 // loop_exit
                  _
              $region51: #{tpu_custom_call.1} parent=35 // pred_fallthru
                _
            $region36: #{tpu_custom_call.1} parent=31 // pred_fallthru
              _
            // Predicated region
            $region37: #{tpu_custom_call.1} parent=31 // pred_check
              _
            $region38: #{tpu_custom_call.1} parent=31 // pred_check_branch
              %238 = sbr.rel (0) target = $region40
            $region39: #{tpu_custom_call.1} parent=31 // pred_region
              loop: start=0, step=1, limit=1
              $region41: #{tpu_custom_call.1} parent=39 // loop_pre_header
                _
              $region42: #{tpu_custom_call.1} parent=39 // loop_header
                %s241 = sphi 0, %s245
                %p242 = scmp.ge.s32.totalorder %s241, 1
                %s246 = sphi %s232, %s232
                %s247 = sphi %s228, %s228
              $region43: #{tpu_custom_call.1} parent=39 // loop_header_branch
                %244 = sbr.rel (%p242) target = $region47
              $region44: #{tpu_custom_call.1} parent=39 // loop_body
                %v248 = vld [vmem:[%s246] sm:$0xf]
                %249 = vst [vmem:[%s247] sm:$0xf] %v248
                %v250 = vld [vmem:[%s246 + $0x10] sm:$0xf]
                %251 = vst [vmem:[%s247 + $0x4] sm:$0xf] %v250
                %v252 = vld [vmem:[%s246 + $0x20] sm:$0xf]
                %253 = vst [vmem:[%s247 + $0x8] sm:$0xf] %v252
                %v254 = vld [vmem:[%s246 + $0x30] sm:$0xf]
                %255 = vst [vmem:[%s247 + $0xc] sm:$0xf] %v254
              $region45: #{tpu_custom_call.1} parent=39 // loop_footer
                %s245 = sadd.s32 1, %s241
              $region46: #{tpu_custom_call.1} parent=39 // loop_footer_branch
                %240 = sbr.rel target = $region42
              $region47: #{tpu_custom_call.1} parent=39 // loop_exit
                _
            $region40: #{tpu_custom_call.1} parent=31 // pred_fallthru
              _
          $region32: #{tpu_custom_call.1} parent=27 // pred_fallthru
            _
          %283 = vnop
        $region28: #{tpu_custom_call.1} parent=23 // pred_fallthru
          _
        // Predicated region
        $region66: #{tpu_custom_call.1} parent=23 // pred_check
          %p284 = pneg %p131
        $region67: #{tpu_custom_call.1} parent=23 // pred_check_branch
          %286 = sbr.rel (%p284) target = $region69
        $region68: #{tpu_custom_call.1} parent=23 // pred_region
          %p287 = scmp.lt.s32.totalorder %s31, 3
          %s288 = scalar_select %p287, %s31, 3
          %p289 = scmp.lt.s32.totalorder %s288, 3
          %s290 = scalar_select %p289, %s288, 3
          %s291 = scalar_lea.vmem %s4, %s290
          %p292 = scmp.lt.s32.totalorder %s31, 3
          %s293 = scalar_select %p292, %s31, 3
        $region69: #{tpu_custom_call.1} parent=23 // pred_fallthru
          _
      $region24: #{tpu_custom_call.1} parent=5 // pred_fallthru
        _
      %p294 = scmp.le.s32.totalorder 1, %s23
      %p295 = scmp.lt.s32.totalorder %s23, 9
      %p296 = pnand %p294, %p295
      %p297 = pneg %p296
      // Predicated region
      $region70: #{tpu_custom_call.1} parent=5 // pred_check
        _
      $region71: #{tpu_custom_call.1} parent=5 // pred_check_branch
        %299 = sbr.rel (%p296) target = $region73
      $region72: #{tpu_custom_call.1} parent=5 // pred_region
        %s300 = ssub.s32 %s23, 1
        %s301 = sand.u32 %s94, 1
        %s302 = sand.u32 %s94, 1
        %s303 = smul.addr %s302, 16
        %s304 = scalar_lea.vmem [#allocation9], %s303
        // Predicated region
        $region74: #{tpu_custom_call.1} parent=72 // pred_check
          %p305 = pneg %p107
        $region75: #{tpu_custom_call.1} parent=72 // pred_check_branch
          %307 = sbr.rel (%p305) target = $region77
        $region76: #{tpu_custom_call.1} parent=72 // pred_region
          _
        $region77: #{tpu_custom_call.1} parent=72 // pred_fallthru
          _
        %p308 = pneg %p56
        %p309 = pneg %p53
        %p310 = pneg %p77
        %p311 = pneg %p74
        %s312 = sand.u32 %s94, 1
        %s313 = sand.u32 %s94, 1
        %s314 = smul.addr %s313, 16
        %s315 = scalar_lea.vmem [#allocation9], %s314
        %p316 = pneg %p107
        %p317 = pneg %p104
        %p318 = scmp.lt.s32.totalorder %s33, 3
        %s319 = scalar_select %p318, %s33, 3
        %p320 = scmp.lt.s32.totalorder %s319, 3
        %s321 = scalar_select %p320, %s319, 3
        %s322 = scalar_lea.vmem %s4, %s321
        %p323 = pneg %p137
        %p324 = pneg %p134
        %p325 = pneg %p171
        %p326 = pneg %p168
        %s327 = sand.u32 %s158, 1
        %s328 = scalar_lea.sflag [#allocation11], %s327
        %s329 = sand.u32 %s158, 1
        %s330 = smul.addr %s329, 8
        %s331 = scalar_lea.vmem [#allocation10], %s330
        %p332 = pneg %p197
        %p333 = pneg %p194
        %p334 = scmp.lt.s32.totalorder %s33, 3
        %s335 = scalar_select %p334, %s33, 3
        %p336 = scmp.lt.s32.totalorder %s33, 3
        %s337 = scalar_select %p336, %s33, 3
        %p338 = scmp.lt.s32.totalorder %s337, 3
        %s339 = scalar_select %p338, %s337, 3
        %s340 = scalar_lea.vmem %s4, %s339
        %p341 = scmp.lt.s32.totalorder %s33, 3
        %s342 = scalar_select %p341, %s33, 3
        %s343 = ssub.s32 %s33, 4
        %p344 = scmp.gt.s32.totalorder %s343, 0
        %s345 = scalar_select %p344, %s343, 0
        %p347 = scmp.eq.s32.totalorder %s33, 0
        // Predicated region
        $region78: #{tpu_custom_call.1} parent=72 // pred_check
          %p348 = pneg %p347
        $region79: #{tpu_custom_call.1} parent=72 // pred_check_branch
          %350 = sbr.rel (%p348) target = $region81
        $region80: #{tpu_custom_call.1} parent=72 // pred_region
          %s351 = smul.u32 %s32, 8
          %s352 = sld [smem:[#allocation8 + %s351]]
          %p353 = scmp.gt.s32.totalorder %s352, 0
          %s354 = scalar_select %p353, %s352, 0
          %p355 = scmp.lt.s32.totalorder %s354, 511
          %s356 = scalar_select %p355, %s354, 511
          %s357 = scalar_lea.vmem %s1, %s356
          %v358 = vld [vmem:[%s357] sm:$0x1]
          %vm359 = vcmask 253952
          %360 = vst.msk [vmem:[#allocation3] sm:$0x1] %vm359, %v358
          %s361 = sadd.s32 %s351, 1
          %s362 = sld [smem:[#allocation8 + %s361]]
          %p363 = scmp.gt.s32.totalorder %s362, 0
          %s364 = scalar_select %p363, %s362, 0
          %p365 = scmp.lt.s32.totalorder %s364, 511
          %s366 = scalar_select %p365, %s364, 511
          %s367 = scalar_lea.vmem %s1, %s366
          %v368 = vld [vmem:[%s367] sm:$0x1]
          %369 = vst.msk [vmem:[#allocation3 + $0x1] sm:$0x1] %vm359, %v368
          %s370 = sadd.s32 %s351, 2
          %s371 = sld [smem:[#allocation8 + %s370]]
          %p372 = scmp.gt.s32.totalorder %s371, 0
          %s373 = scalar_select %p372, %s371, 0
          %p374 = scmp.lt.s32.totalorder %s373, 511
          %s375 = scalar_select %p374, %s373, 511
          %s376 = scalar_lea.vmem %s1, %s375
          %v377 = vld [vmem:[%s376] sm:$0x1]
          %378 = vst.msk [vmem:[#allocation3 + $0x2] sm:$0x1] %vm359, %v377
          %s379 = sadd.s32 %s351, 3
          %s380 = sld [smem:[#allocation8 + %s379]]
          %p381 = scmp.gt.s32.totalorder %s380, 0
          %s382 = scalar_select %p381, %s380, 0
          %p383 = scmp.lt.s32.totalorder %s382, 511
          %s384 = scalar_select %p383, %s382, 511
          %s385 = scalar_lea.vmem %s1, %s384
          %v386 = vld [vmem:[%s385] sm:$0x1]
          %387 = vst.msk [vmem:[#allocation3 + $0x3] sm:$0x1] %vm359, %v386
          %s388 = sadd.s32 %s351, 4
          %s389 = sld [smem:[#allocation8 + %s388]]
          %p390 = scmp.gt.s32.totalorder %s389, 0
          %s391 = scalar_select %p390, %s389, 0
          %p392 = scmp.lt.s32.totalorder %s391, 511
          %s393 = scalar_select %p392, %s391, 511
          %s394 = scalar_lea.vmem %s1, %s393
          %v395 = vld [vmem:[%s394] sm:$0x1]
          %396 = vst.msk [vmem:[#allocation3 + $0x4] sm:$0x1] %vm359, %v395
          %s397 = sadd.s32 %s351, 5
          %s398 = sld [smem:[#allocation8 + %s397]]
          %p399 = scmp.gt.s32.totalorder %s398, 0
          %s400 = scalar_select %p399, %s398, 0
          %p401 = scmp.lt.s32.totalorder %s400, 511
          %s402 = scalar_select %p401, %s400, 511
          %s403 = scalar_lea.vmem %s1, %s402
          %v404 = vld [vmem:[%s403] sm:$0x1]
          %405 = vst.msk [vmem:[#allocation3 + $0x5] sm:$0x1] %vm359, %v404
          %s406 = sadd.s32 %s351, 6
          %s407 = sld [smem:[#allocation8 + %s406]]
          %p408 = scmp.gt.s32.totalorder %s407, 0
          %s409 = scalar_select %p408, %s407, 0
          %p410 = scmp.lt.s32.totalorder %s409, 511
          %s411 = scalar_select %p410, %s409, 511
          %s412 = scalar_lea.vmem %s1, %s411
          %v413 = vld [vmem:[%s412] sm:$0x1]
          %414 = vst.msk [vmem:[#allocation3 + $0x6] sm:$0x1] %vm359, %v413
          %s415 = sadd.s32 %s351, 7
          %s416 = sld [smem:[#allocation8 + %s415]]
          %p417 = scmp.gt.s32.totalorder %s416, 0
          %s418 = scalar_select %p417, %s416, 0
          %p419 = scmp.lt.s32.totalorder %s418, 511
          %s420 = scalar_select %p419, %s418, 511
          %s421 = scalar_lea.vmem %s1, %s420
          %v422 = vld [vmem:[%s421] sm:$0x1]
          %423 = vst.msk [vmem:[#allocation3 + $0x7] sm:$0x1] %vm359, %v422
          %v424 = vld [vmem:[#allocation3] sm:$0xff]
          %v425 = vld [vmem:[%s2] sm:$0x1]
          %v427 = vlaneseq
          %v428 = vshrl.u32 %v427, 7
          %v429 = vsub.s32 0, %v428
          %v430 = vrot.slane %v425, %v429
          %v432 = vadd.f32 %v424, %v430
          %v433 = vpack.c.bf16 %v432, %v432
          %vm434 = vcmask 257024
          %435 = vst.msk [vmem:[#allocation4] sm:$0xf] %vm434, %v433
          %vm436 = vcmask 7168
          %437 = vst.msk [vmem:[#allocation5] sm:$0xff] %vm436, -inf
          %438 = vst.msk [vmem:[#allocation6] sm:$0xff] %vm436, 0.0
          %vm439 = vcmask 261120
          %440 = vst.msk [vmem:[#allocation12] sm:$0xff] %vm439, %v432
        $region81: #{tpu_custom_call.1} parent=72 // pred_fallthru
          _
        %p441 = scmp.lt.s32.totalorder %s33, 4
        // Predicated region
        $region82: #{tpu_custom_call.1} parent=72 // pred_check
          %p442 = pneg %p441
        $region83: #{tpu_custom_call.1} parent=72 // pred_check_branch
          %444 = sbr.rel (%p442) target = $region85
        $region84: #{tpu_custom_call.1} parent=72 // pred_region
          %v445 = vld [vmem:[#allocation4] sm:$0xf]
          %v446 = vld [vmem:[%s304] sm:$0xf]
          %v447 = vld [vmem:[%s304 + $0x4] sm:$0xf]
          %v448 = vld [vmem:[%s304 + $0x8] sm:$0xf]
          %v449 = vld [vmem:[%s304 + $0xc] sm:$0xf]
          %v450 = vld [vmem:[%s340] sm:$0x1]
          %v452 = vlaneseq
          %v453 = vshrl.u32 %v452, 7
          %v454 = vsub.s32 0, %v453
          %v455 = vrot.slane %v450, %v454
          %v461 = vunpack.c.l.b16 %v446
          %v462 = vunpack.c.l.b16 %v447
          %v463 = vunpack.c.l.b16 %v448
          %v464 = vunpack.c.l.b16 %v449
          %v465 = vpack.c.b16 %v462, %v461
          %v466 = vpack.c.b16 %v464, %v463
          %vm469 = vcmask 261120
          %v471 = vsel %vm469, %v445, 0
          %473 = vmatprep.subr.bf16.mxu0 0
          %474 = vmatpush1.bf16.msra.mxu0 %v465
          %475 = vmatprep.subr.bf16.mxu0 0
          %476 = vmatpush1.bf16.msra.mxu0 %v466
          %477 = vmatprep.subr.bf16.mxu0 0
          %478 = vmatpush1.bf16.msra.mxu0 0
          %479 = vmatprep.subr.bf16.mxu0 0
          %480 = vmatpush1.bf16.msra.mxu0 0
          %481 = vmatprep.subr.bf16.mxu0 0
          %482 = vmatpush1.bf16.msra.mxu0 0
          %483 = vmatprep.subr.bf16.mxu0 0
          %484 = vmatpush1.bf16.msra.mxu0 0
          %485 = vmatprep.subr.bf16.mxu0 0
          %486 = vmatpush1.bf16.msra.mxu0 0
          %487 = vmatprep.subr.bf16.mxu0 0
          %488 = vmatpush1.bf16.msra.mxu0 0
          %489 = vmatprep.subr.bf16.mxu0 0
          %490 = vmatpush1.bf16.msra.mxu0 0
          %491 = vmatprep.subr.bf16.mxu0 0
          %492 = vmatpush1.bf16.msra.mxu0 0
          %493 = vmatprep.subr.bf16.mxu0 0
          %494 = vmatpush1.bf16.msra.mxu0 0
          %495 = vmatprep.subr.bf16.mxu0 0
          %496 = vmatpush1.bf16.msra.mxu0 0
          %497 = vmatprep.subr.bf16.mxu0 0
          %498 = vmatpush1.bf16.msra.mxu0 0
          %499 = vmatprep.subr.bf16.mxu0 0
          %500 = vmatpush1.bf16.msra.mxu0 0
          %501 = vmatprep.subr.bf16.mxu0 0
          %502 = vmatpush1.bf16.msra.mxu0 0
          %503 = vmatprep.subr.bf16.mxu0 0
          %504 = vmatpush1.bf16.msra.mxu0 0
          %505 = vmatprep.mubr.bf16.mxu0 0
          %506 = vmatmul.mubr.bf16.gmra.mrb[0].mxu0 %v471
          %v507 = vpop.f32.mrb[0].mxu0
          %v508 = vadd.f32 %v455, %v507
          %v509 = vpop.f32.mrb[0].mxu0
          %v510 = vpop.f32.mrb[0].mxu0
          %v511 = vpop.f32.mrb[0].mxu0
          %512 = vdwg.mxu0
          %s513 = smul.u32 %s33, 8
          %s514 = scalar_lea.vmem [#allocation2], %s513
          %515 = vst [vmem:[%s514] sm:$0xff] %v508
          %516 = vmax.xlane.f32.xlu0 %v508
          %v517 = vpop.xlane.xlu0 %516
          %v518 = vld [vmem:[#allocation5] sm:$0xff]
          %v519 = vmax.f32 %v518, %v517
          %v520 = vld [vmem:[#allocation6] sm:$0xff]
          %v521 = vsub.f32 %v518, %v519
          %v522 = vmul.f32 %v521, 1.442695
          %v523 = vpow.pop %v522
          %v524 = vmul.f32 %v520, %v523
          %526 = vset.pattern.permute.xlu0 0
          %527 = vperm.xlu0 %526, %v519
          %v528 = vpop.permute.xlu0 %527
          %v530 = vsub.f32 %v508, %v528
          %v531 = vmul.f32 %v530, 1.442695
          %v532 = vpow.pop %v531
          %533 = vadd.xlane.f32.xlu0 %v532
          %v534 = vpop.xlane.xlu0 %533
          %v535 = vadd.f32 %v524, %v534
          %vm536 = vcmask 7168
          %537 = vst.msk [vmem:[#allocation6] sm:$0xff] %vm536, %v535
          %538 = vst.msk [vmem:[#allocation5] sm:$0xff] %vm536, %v519
        $region85: #{tpu_custom_call.1} parent=72 // pred_fallthru
          _
        %p539 = scmp.eq.s32.totalorder %s33, 3
        // Predicated region
        $region86: #{tpu_custom_call.1} parent=72 // pred_check
          %p540 = pneg %p539
        $region87: #{tpu_custom_call.1} parent=72 // pred_check_branch
          %542 = sbr.rel (%p540) target = $region89
        $region88: #{tpu_custom_call.1} parent=72 // pred_region
          %v543 = vld [vmem:[#allocation5] sm:$0xff]
          %v544 = vld [vmem:[#allocation6] sm:$0xff]
          %v545 = vlog2.pop %v544
          %v546 = vmul.f32 %v545, 0.6931472
          %v547 = vadd.f32 %v543, %v546
          %vm548 = vcmask 7168
          %549 = vst.msk [vmem:[#allocation5] sm:$0xff] %vm548, %v547
        $region89: #{tpu_custom_call.1} parent=72 // pred_fallthru
          _
        %p550 = scmp.ge.s32.totalorder %s33, 4
        // Predicated region
        $region90: #{tpu_custom_call.1} parent=72 // pred_check
          %p551 = pneg %p550
        $region91: #{tpu_custom_call.1} parent=72 // pred_check_branch
          %553 = sbr.rel (%p551) target = $region93
        $region92: #{tpu_custom_call.1} parent=72 // pred_region
          %s554 = ssub.s32 %s33, 4
          %s555 = smul.u32 %s554, 8
          %s556 = scalar_lea.vmem [#allocation2], %s555
          %v557 = vld [vmem:[%s556] sm:$0xff]
          %v558 = vld [vmem:[#allocation5] sm:$0xff]
          %560 = vset.pattern.permute.xlu0 0
          %561 = vperm.xlu0 %560, %v558
          %v562 = vpop.permute.xlu0 %561
          %v564 = vsub.f32 %v557, %v562
          %565 = vst [vmem:[%s331] sm:$0xff] %v564
        $region93: #{tpu_custom_call.1} parent=72 // pred_fallthru
          _
        %s566 = sand.u32 %s158, 1
        %s567 = scalar_lea.sflag [#allocation11], %s566
        %s568 = sand.u32 %s158, 1
        %s569 = smul.addr %s568, 8
        %s570 = scalar_lea.vmem [#allocation10], %s569
        // Predicated region
        $region94: #{tpu_custom_call.1} parent=72 // pred_check
          %p571 = pneg %p168
        $region95: #{tpu_custom_call.1} parent=72 // pred_check_branch
          %573 = sbr.rel (%p571) target = $region97
        $region96: #{tpu_custom_call.1} parent=72 // pred_region
          %s574 = ssub.s32 %s33, 4
          %p575 = scmp.gt.s32.totalorder %s574, 0
          %s576 = scalar_select %p575, %s574, 0
          %s578 = ssub.s32 128, 128
          %579 = vsyncadd %s567, %s578
          %s580 = smul.addr %s32, 4
          %s581 = sadd.s32 %s576, %s580
          %s582 = smul.addr %s581, 128
          %s583 = scalar_lea.hbm %s5, %s582
          %s585 = sshll.u32 %s570, 4
          %s586 = int_to_ptr.vmem [resolvable:$true] %s585
          %588 = dma.vmem_to_hbm [thread:$0]  %s586, 128, %s583, %s567
        $region97: #{tpu_custom_call.1} parent=72 // pred_fallthru
          _
        // Predicated region
        $region98: #{tpu_custom_call.1} parent=72 // pred_check
          %p589 = pneg %p194
        $region99: #{tpu_custom_call.1} parent=72 // pred_check_branch
          %591 = sbr.rel (%p589) target = $region101
        $region100: #{tpu_custom_call.1} parent=72 // pred_region
          %s593 = ssub.s32 128, 128
          %594 = vsyncadd [#allocation13], %s593
          %s595 = smul.addr %s32, 128
          %s596 = scalar_lea.hbm %s6, %s595
          %s598 = sshll.u32 [#allocation12], 4
          %s599 = int_to_ptr.vmem [resolvable:$true] %s598
          %601 = dma.vmem_to_hbm [thread:$0]  %s599, 128, %s596, [#allocation13]
        $region101: #{tpu_custom_call.1} parent=72 // pred_fallthru
          _
        // Predicated region
        $region102: #{tpu_custom_call.1} parent=72 // pred_check
          %p602 = pneg %p194
        $region103: #{tpu_custom_call.1} parent=72 // pred_check_branch
          %604 = sbr.rel (%p602) target = $region105
        $region104: #{tpu_custom_call.1} parent=72 // pred_region
          %605 = dma.done [#allocation13], 128
        $region105: #{tpu_custom_call.1} parent=72 // pred_fallthru
          _
      $region73: #{tpu_custom_call.1} parent=5 // pred_fallthru
        _
      %p606 = scmp.le.s32.totalorder 2, %s23
      // Predicated region
      $region106: #{tpu_custom_call.1} parent=5 // pred_check
        %p607 = pneg %p606
      $region107: #{tpu_custom_call.1} parent=5 // pred_check_branch
        %609 = sbr.rel (%p607) target = $region109
      $region108: #{tpu_custom_call.1} parent=5 // pred_region
        %s610 = ssub.s32 %s23, 2
        // Predicated region
        $region110: #{tpu_custom_call.1} parent=108 // pred_check
          %p611 = pneg %p174
        $region111: #{tpu_custom_call.1} parent=108 // pred_check_branch
          %613 = sbr.rel (%p611) target = $region113
        $region112: #{tpu_custom_call.1} parent=108 // pred_region
          %s614 = sand.u32 %s159, 1
          %s615 = scalar_lea.sflag [#allocation11], %s614
          %s616 = sand.u32 %s159, 1
          %s617 = smul.addr %s616, 8
          %s618 = scalar_lea.vmem [#allocation10], %s617
          %619 = dma.done %s615, 128
        $region113: #{tpu_custom_call.1} parent=108 // pred_fallthru
          _
      $region109: #{tpu_custom_call.1} parent=5 // pred_fallthru
        _
    $region6: #{tpu_custom_call.1} parent=1 // loop_footer
      %s27 = sadd.s32 1, %s23
    $region7: #{tpu_custom_call.1} parent=1 // loop_footer_branch
      %22 = sbr.rel target = $region3
    $region8: #{tpu_custom_call.1} parent=1 // loop_exit
      _
    %620 = vsyncpa [#allocation11], 1
    %s621 = scalar_lea.sflag [#allocation11], 1
    %622 = vsyncpa %s621, 1
    %623 = vsyncpa [#allocation13], 1

</llo_original>
